<compile_context>
chip_gen: v5e
topology: v5e:2x2
jax: 0.10.0
libtpu: 0.0.40
codegen_flags: <defaults>
</compile_context>

<pallas_src>
import functools

import jax
import jax.numpy as jnp
from jax.experimental import pallas as pl
from jax.experimental.pallas import tpu as pltpu

LANES = 128
MAX_BLOCK_ROWS = 2048  # (2048, 128) f32 tile = 1 MiB per input per buffer


def _dice_kernel(n_ref, x_ref, t_ref, o_ref, acc_xt, acc_x, acc_t,
                 *, smooth, block_rows):
    step = pl.program_id(0)

    @pl.when(step == 0)
    def _():
        acc_xt[...] = jnp.zeros_like(acc_xt)
        acc_x[...] = jnp.zeros_like(acc_x)
        acc_t[...] = jnp.zeros_like(acc_t)

    # Mask off elements beyond the true flat length n (handles the lane pad and
    # any partial final row block).
    n = n_ref[0]
    row_base = step * block_rows
    row_idx = jax.lax.broadcasted_iota(jnp.int32, (block_rows, LANES), 0)
    lane_idx = jax.lax.broadcasted_iota(jnp.int32, (block_rows, LANES), 1)
    flat_idx = (row_base + row_idx) * LANES + lane_idx
    valid = flat_idx < n

    x = x_ref[...].astype(jnp.float32)
    t = t_ref[...].astype(jnp.float32)
    sig = jnp.where(valid, jax.nn.sigmoid(x), 0.0)
    tgt = jnp.where(valid, t, 0.0)

    # Steady state: pure VPU elementwise adds into VMEM vector accumulators.
    acc_xt[...] += sig * tgt
    acc_x[...] += sig
    acc_t[...] += tgt

    @pl.when(step == pl.num_programs(0) - 1)
    def _():
        inter = jnp.sum(acc_xt[...])
        s_in = jnp.sum(acc_x[...])
        s_tg = jnp.sum(acc_t[...])
        dice = (2.0 * inter + smooth) / (s_in + s_tg + smooth)
        o_ref[...] = jnp.full((1, 1), 1.0 - dice, dtype=o_ref.dtype)


def dice_loss(inputs, targets, smooth=1.0):
    """Pallas TPU implementation of DiceLoss.forward (returns a scalar)."""
    x = jnp.ravel(inputs)
    t = jnp.ravel(targets)
    n = x.shape[0]

    # Lane-align (only pads when n is not a multiple of 128; pad values are
    # masked out inside the kernel, so the pad contents are irrelevant).
    rows = pl.cdiv(n, LANES)
    padded = rows * LANES
    if padded != n:
        x = jnp.pad(x, (0, padded - n))
        t = jnp.pad(t, (0, padded - n))

    x2d = x.reshape(rows, LANES)
    t2d = t.reshape(rows, LANES)

    # Largest tile-aligned row block up to MAX_BLOCK_ROWS (multiple of 8).
    block_rows = min(MAX_BLOCK_ROWS, ((rows + 7) // 8) * 8)
    grid = pl.cdiv(rows, block_rows)

    n_arr = jnp.asarray([n], dtype=jnp.int32)

    out = pl.pallas_call(
        functools.partial(_dice_kernel, smooth=float(smooth),
                          block_rows=block_rows),
        out_shape=jax.ShapeDtypeStruct((1, 1), jnp.float32),
        grid_spec=pltpu.PrefetchScalarGridSpec(
            num_scalar_prefetch=1,
            grid=(grid,),
            in_specs=[
                pl.BlockSpec((block_rows, LANES), lambda i, n_ref: (i, 0)),
                pl.BlockSpec((block_rows, LANES), lambda i, n_ref: (i, 0)),
            ],
            out_specs=pl.BlockSpec((1, 1), lambda i, n_ref: (0, 0)),
            scratch_shapes=[
                pltpu.VMEM((block_rows, LANES), jnp.float32),
                pltpu.VMEM((block_rows, LANES), jnp.float32),
                pltpu.VMEM((block_rows, LANES), jnp.float32),
            ],
        ),
        compiler_params=pltpu.CompilerParams(
            dimension_semantics=("arbitrary",),
        ),
        # TODO(synk): on v7x, shard the row-block loop across the 2 TensorCores
        # (leading "parallel" axis with per-core partial outputs) for up to 2x.
    )(n_arr, x2d, t2d)
    return out[0, 0]


if __name__ == "__main__":
    key = jax.random.PRNGKey(0)
    k1, k2 = jax.random.split(key)

    # Small shapes consistent with a segmentation-style logits/targets pair.
    x = jax.random.normal(k1, (2, 4, 16, 16), dtype=jnp.float32)       # logits
    tgt = (jax.random.uniform(k2, (2, 4, 16, 16)) > 0.5).astype(jnp.float32)

    loss = dice_loss(x, tgt, smooth=1.0)
    jax.block_until_ready(loss)

    # Reference check in plain JAX (same math as the PyTorch module).
    xs = jax.nn.sigmoid(x.reshape(-1))
    ts = tgt.reshape(-1)
    ref = 1.0 - (2.0 * jnp.sum(xs * ts) + 1.0) / (jnp.sum(xs) + jnp.sum(ts) + 1.0)
    assert jnp.allclose(loss, ref, rtol=1e-5, atol=1e-5), (loss, ref)

    print("KERNEL_OK")
</pallas_src>

<mosaic_0001>
module attributes {stable_mosaic.version = 11 : i64} {
  func.func @_dice_kernel(%arg0: i32, %arg1: memref<1xi32, #tpu.memory_space<smem>>, %arg2: memref<16x128xf32, #tpu.memory_space<vmem>>, %arg3: memref<16x128xf32, #tpu.memory_space<vmem>>, %arg4: memref<1x1xf32, #tpu.memory_space<vmem>>, %arg5: memref<16x128xf32, #tpu.memory_space<vmem>>, %arg6: memref<16x128xf32, #tpu.memory_space<vmem>>, %arg7: memref<16x128xf32, #tpu.memory_space<vmem>>) attributes {dimension_semantics = [#tpu.dimension_semantics<arbitrary>], iteration_bounds = array<i64: 1>, scalar_prefetch = 1 : i64, scratch_operands = 3 : i64, tpu.core_type = #tpu.core_type<tc>, window_params = [{transform_indices = @transform_0, window_bounds = array<i64: 16, 128>}, {transform_indices = @transform_1, window_bounds = array<i64: 16, 128>}, {pipeline_mode = #tpu.pipeline_mode<synchronous>, transform_indices = @transform_2, window_bounds = array<i64: 1, 1>}]} {
    %c0_i32 = arith.constant 0 : i32
    %0 = arith.cmpi eq, %arg0, %c0_i32 : i32
    %1 = arith.extui %0 : i1 to i32
    %c0_i32_0 = arith.constant 0 : i32
    %2 = arith.cmpi ne, %1, %c0_i32_0 : i32
    scf.if %2 {
      %cst_21 = arith.constant 0.000000e+00 : f32
      %38 = vector.broadcast %cst_21 : f32 to vector<16x128xf32>
      %c0_22 = arith.constant 0 : index
      %c0_23 = arith.constant 0 : index
      %39 = vector.load %arg5[%c0_22, %c0_23] : memref<16x128xf32, #tpu.memory_space<vmem>>, vector<16x128xf32>
      tpu.vector_store %arg5[%c0_22, %c0_23], %38 {strides = array<i32>} : memref<16x128xf32, #tpu.memory_space<vmem>>, vector<16x128xf32>,
      %cst_24 = arith.constant 0.000000e+00 : f32
      %40 = vector.broadcast %cst_24 : f32 to vector<16x128xf32>
      %c0_25 = arith.constant 0 : index
      %c0_26 = arith.constant 0 : index
      %41 = vector.load %arg6[%c0_25, %c0_26] : memref<16x128xf32, #tpu.memory_space<vmem>>, vector<16x128xf32>
      tpu.vector_store %arg6[%c0_25, %c0_26], %40 {strides = array<i32>} : memref<16x128xf32, #tpu.memory_space<vmem>>, vector<16x128xf32>,
      %cst_27 = arith.constant 0.000000e+00 : f32
      %42 = vector.broadcast %cst_27 : f32 to vector<16x128xf32>
      %c0_28 = arith.constant 0 : index
      %c0_29 = arith.constant 0 : index
      %43 = vector.load %arg7[%c0_28, %c0_29] : memref<16x128xf32, #tpu.memory_space<vmem>>, vector<16x128xf32>
      tpu.vector_store %arg7[%c0_28, %c0_29], %42 {strides = array<i32>} : memref<16x128xf32, #tpu.memory_space<vmem>>, vector<16x128xf32>,
    } else {
    }
    %c0 = arith.constant 0 : index
    %3 = memref.load %arg1[%c0] : memref<1xi32, #tpu.memory_space<smem>>
    %c16_i32 = arith.constant 16 : i32
    %4 = arith.muli %arg0, %c16_i32 : i32
    %5 = tpu.iota {dimensions = array<i32: 0>} : vector<16x128xi32>
    %6 = tpu.iota {dimensions = array<i32: 1>} : vector<16x128xi32>
    %7 = vector.broadcast %4 : i32 to vector<16x128xi32>
    %8 = arith.addi %7, %5 : vector<16x128xi32>
    %c128_i32 = arith.constant 128 : i32
    %9 = vector.broadcast %c128_i32 : i32 to vector<16x128xi32>
    %10 = arith.muli %8, %9 : vector<16x128xi32>
    %11 = arith.addi %10, %6 : vector<16x128xi32>
    %12 = vector.broadcast %3 : i32 to vector<16x128xi32>
    %13 = arith.cmpi slt, %11, %12 : vector<16x128xi32>
    %c0_1 = arith.constant 0 : index
    %c0_2 = arith.constant 0 : index
    %14 = vector.load %arg2[%c0_1, %c0_2] : memref<16x128xf32, #tpu.memory_space<vmem>>, vector<16x128xf32>
    %c0_3 = arith.constant 0 : index
    %c0_4 = arith.constant 0 : index
    %15 = vector.load %arg3[%c0_3, %c0_4] : memref<16x128xf32, #tpu.memory_space<vmem>>, vector<16x128xf32>
    %16 = arith.negf %14 : vector<16x128xf32>
    %17 = math.exp %16 : vector<16x128xf32>
    %cst = arith.constant 1.000000e+00 : f32
    %18 = vector.broadcast %cst : f32 to vector<16x128xf32>
    %19 = arith.addf %18, %17 : vector<16x128xf32>
    %20 = arith.divf %18, %19 : vector<16x128xf32>
    %cst_5 = arith.constant 0.000000e+00 : f32
    %21 = vector.broadcast %cst_5 : f32 to vector<16x128xf32>
    %22 = arith.select %13, %20, %21 : vector<16x128xi1>, vector<16x128xf32>
    %cst_6 = arith.constant 0.000000e+00 : f32
    %23 = vector.broadcast %cst_6 : f32 to vector<16x128xf32>
    %24 = arith.select %13, %15, %23 : vector<16x128xi1>, vector<16x128xf32>
    %c0_7 = arith.constant 0 : index
    %c0_8 = arith.constant 0 : index
    %25 = vector.load %arg5[%c0_7, %c0_8] : memref<16x128xf32, #tpu.memory_space<vmem>>, vector<16x128xf32>
    %26 = arith.mulf %22, %24 : vector<16x128xf32>
    %27 = arith.addf %25, %26 : vector<16x128xf32>
    %c0_9 = arith.constant 0 : index
    %c0_10 = arith.constant 0 : index
    %28 = vector.load %arg5[%c0_9, %c0_10] : memref<16x128xf32, #tpu.memory_space<vmem>>, vector<16x128xf32>
    tpu.vector_store %arg5[%c0_9, %c0_10], %27 {strides = array<i32>} : memref<16x128xf32, #tpu.memory_space<vmem>>, vector<16x128xf32>,
    %c0_11 = arith.constant 0 : index
    %c0_12 = arith.constant 0 : index
    %29 = vector.load %arg6[%c0_11, %c0_12] : memref<16x128xf32, #tpu.memory_space<vmem>>, vector<16x128xf32>
    %30 = arith.addf %29, %22 : vector<16x128xf32>
    %c0_13 = arith.constant 0 : index
    %c0_14 = arith.constant 0 : index
    %31 = vector.load %arg6[%c0_13, %c0_14] : memref<16x128xf32, #tpu.memory_space<vmem>>, vector<16x128xf32>
    tpu.vector_store %arg6[%c0_13, %c0_14], %30 {strides = array<i32>} : memref<16x128xf32, #tpu.memory_space<vmem>>, vector<16x128xf32>,
    %c0_15 = arith.constant 0 : index
    %c0_16 = arith.constant 0 : index
    %32 = vector.load %arg7[%c0_15, %c0_16] : memref<16x128xf32, #tpu.memory_space<vmem>>, vector<16x128xf32>
    %33 = arith.addf %32, %24 : vector<16x128xf32>
    %c0_17 = arith.constant 0 : index
    %c0_18 = arith.constant 0 : index
    %34 = vector.load %arg7[%c0_17, %c0_18] : memref<16x128xf32, #tpu.memory_space<vmem>>, vector<16x128xf32>
    tpu.vector_store %arg7[%c0_17, %c0_18], %33 {strides = array<i32>} : memref<16x128xf32, #tpu.memory_space<vmem>>, vector<16x128xf32>,
    %c0_i32_19 = arith.constant 0 : i32
    %35 = arith.cmpi eq, %arg0, %c0_i32_19 : i32
    %36 = arith.extui %35 : i1 to i32
    %c0_i32_20 = arith.constant 0 : i32
    %37 = arith.cmpi ne, %36, %c0_i32_20 : i32
    scf.if %37 {
      %c0_21 = arith.constant 0 : index
      %c0_22 = arith.constant 0 : index
      %38 = vector.load %arg5[%c0_21, %c0_22] : memref<16x128xf32, #tpu.memory_space<vmem>>, vector<16x128xf32>
      %39 = vector.shape_cast %38 : vector<16x128xf32> to vector<1x16x128xf32>
      %cst_23 = arith.constant dense<0.000000e+00> : vector<1xf32>
      %40 = vector.multi_reduction <add>, %39, %cst_23 [1, 2] : vector<1x16x128xf32> to vector<1xf32>
      %41 = vector.shape_cast %40 : vector<1xf32> to vector<1x1x1xf32>
      %42 = vector.extract %41[0, 0, 0] : f32 from vector<1x1x1xf32>
      %c0_24 = arith.constant 0 : index
      %c0_25 = arith.constant 0 : index
      %43 = vector.load %arg6[%c0_24, %c0_25] : memref<16x128xf32, #tpu.memory_space<vmem>>, vector<16x128xf32>
      %44 = vector.shape_cast %43 : vector<16x128xf32> to vector<1x16x128xf32>
      %cst_26 = arith.constant dense<0.000000e+00> : vector<1xf32>
      %45 = vector.multi_reduction <add>, %44, %cst_26 [1, 2] : vector<1x16x128xf32> to vector<1xf32>
      %46 = vector.shape_cast %45 : vector<1xf32> to vector<1x1x1xf32>
      %47 = vector.extract %46[0, 0, 0] : f32 from vector<1x1x1xf32>
      %c0_27 = arith.constant 0 : index
      %c0_28 = arith.constant 0 : index
      %48 = vector.load %arg7[%c0_27, %c0_28] : memref<16x128xf32, #tpu.memory_space<vmem>>, vector<16x128xf32>
      %49 = vector.shape_cast %48 : vector<16x128xf32> to vector<1x16x128xf32>
      %cst_29 = arith.constant dense<0.000000e+00> : vector<1xf32>
      %50 = vector.multi_reduction <add>, %49, %cst_29 [1, 2] : vector<1x16x128xf32> to vector<1xf32>
      %51 = vector.shape_cast %50 : vector<1xf32> to vector<1x1x1xf32>
      %52 = vector.extract %51[0, 0, 0] : f32 from vector<1x1x1xf32>
      %cst_30 = arith.constant 2.000000e+00 : f32
      %53 = arith.mulf %cst_30, %42 : f32
      %cst_31 = arith.constant 1.000000e+00 : f32
      %54 = arith.addf %53, %cst_31 : f32
      %55 = arith.addf %47, %52 : f32
      %cst_32 = arith.constant 1.000000e+00 : f32
      %56 = arith.addf %55, %cst_32 : f32
      %57 = arith.divf %54, %56 : f32
      %cst_33 = arith.constant 1.000000e+00 : f32
      %58 = arith.subf %cst_33, %57 : f32
      %59 = vector.broadcast %58 : f32 to vector<1x1xf32>
      %c0_34 = arith.constant 0 : index
      %c0_35 = arith.constant 0 : index
      %60 = vector.load %arg4[%c0_34, %c0_35] : memref<1x1xf32, #tpu.memory_space<vmem>>, vector<1x1xf32>
      tpu.vector_store %arg4[%c0_34, %c0_35], %59 {strides = array<i32>} : memref<1x1xf32, #tpu.memory_space<vmem>>, vector<1x1xf32>,
    } else {
    }
    return
  }
  func.func @transform_0(%arg0: i32, %arg1: memref<1xi32, #tpu.memory_space<smem>>) -> (i32, i32) {
    %c0_i32 = arith.constant 0 : i32
    %c0_i32_0 = arith.constant 0 : i32
    return %arg0, %c0_i32 : i32, i32
  }
  func.func @transform_1(%arg0: i32, %arg1: memref<1xi32, #tpu.memory_space<smem>>) -> (i32, i32) {
    %c0_i32 = arith.constant 0 : i32
    %c0_i32_0 = arith.constant 0 : i32
    return %arg0, %c0_i32 : i32, i32
  }
  func.func @transform_2(%arg0: i32, %arg1: memref<1xi32, #tpu.memory_space<smem>>) -> (i32, i32) {
    %c0_i32 = arith.constant 0 : i32
    %c0_i32_0 = arith.constant 0 : i32
    %c0_i32_1 = arith.constant 0 : i32
    return %c0_i32, %c0_i32_0 : i32, i32
  }
}

</mosaic_0001>

<llo_original>
// kernel: tpu_custom_call.1
$region0: #{tpu_custom_call.1}
  #allocation0 [shape = 'u32[]', space=smem, size = 0x4, offset = 0x4, fixed_abs, tag = 'smem constant byte address 0x4 - core index']
  #allocation1 [shape = 'u32[72,128]{1,0:T(1,128)}', space=vmem, size = 0x9000, scoped, tag = 'internal scratch']
  #allocation2 [shape = 'f32[16,128]{1,0:T(8,128)}', space=vmem, size = 0x2000, scoped, tag = 'scratch operand']
  #allocation3 [shape = 'f32[16,128]{1,0:T(8,128)}', space=vmem, size = 0x2000, scoped, tag = 'scratch operand']
  #allocation4 [shape = 'f32[16,128]{1,0:T(8,128)}', space=vmem, size = 0x2000, scoped, tag = 'scratch operand']
  #allocation5 [shape = 's32[1]{0}', space=sflag, size = 0x4, scoped, tag = 'scoped memory for tpu_custom_call.1']
  #allocation6 [shape = 's32[1]{0:T(128)S(6)}', space=smem, size = 0x200, scoped, tag = 'prefetched SMEM operand 0']
  %s0 = inlined_call_operand.<no memory space> [shape: s32[1], index: 0, kind: input, shape index: {}]
  %s1 = inlined_call_operand.hbm [shape: f32[16,128], index: 1, kind: input, shape index: {}]
  %s2 = inlined_call_operand.hbm [shape: f32[16,128], index: 2, kind: input, shape index: {}]
  %s3 = inlined_call_operand.hbm [shape: f32[1,1], index: 3, kind: output, shape index: {}]
  %s4 = sld [smem:[#allocation0]]
  $region34: #{tpu_custom_call.1} parent=0
    _
  %s6 = ssub.s32 1, %s4
  %s7 = scalar_select 0, %s6, %s4
  %8 = sst [smem:[#allocation6]] %s0
  $region1: #{tpu_custom_call.1} parent=0
    #allocation7 [shape = 'u8[8192]{0}', space=vmem, size = 0x2000, scoped, tag = 'input window, operand 1, single buffered']
    #allocation8 [shape = 's32[1]{0}', space=sflag, size = 0x4, scoped, tag = 'scoped memory for tpu_custom_call.1']
    #allocation9 [shape = 's32[1]{0}', space=sflag, size = 0x4, scoped, tag = 'scoped memory for tpu_custom_call.1']
    #allocation10 [shape = 'u8[8192]{0}', space=vmem, size = 0x2000, scoped, tag = 'input window, operand 2, single buffered']
    #allocation11 [shape = 's32[1]{0}', space=sflag, size = 0x4, scoped, tag = 'scoped memory for tpu_custom_call.1']
    #allocation12 [shape = 'u8[512]{0}', space=vmem, size = 0x400, scoped, tag = 'output window, operand 0, single buffered']
    %9 = vsyncpa [#allocation8], 0
    %10 = vsyncpa [#allocation11], 0
    %11 = vsyncpa [#allocation9], 0
    // Predicated region
    $region2: #{tpu_custom_call.1} parent=1 // pred_check
      _
    $region3: #{tpu_custom_call.1} parent=1 // pred_check_branch
      %13 = sbr.rel (0) target = $region5
    $region4: #{tpu_custom_call.1} parent=1 // pred_region
      %15 = vsyncadd [#allocation8], 0
      %s16 = sshll.u32 %s1, 4
      %s17 = int_to_ptr.hbm [resolvable:$true] %s16
      %s18 = sshll.u32 [#allocation7], 4
      %s19 = int_to_ptr.vmem [resolvable:$true] %s18
      %24 = dma.hbm_to_vmem [thread:$0]  %s17, 256, %s19, [#allocation8], 128, 128, 8
    $region5: #{tpu_custom_call.1} parent=1 // pred_fallthru
      _
    // Predicated region
    $region6: #{tpu_custom_call.1} parent=1 // pred_check
      _
    $region7: #{tpu_custom_call.1} parent=1 // pred_check_branch
      %26 = sbr.rel (0) target = $region9
    $region8: #{tpu_custom_call.1} parent=1 // pred_region
      %28 = vsyncadd [#allocation11], 0
      %s29 = sshll.u32 %s2, 4
      %s30 = int_to_ptr.hbm [resolvable:$true] %s29
      %s31 = sshll.u32 [#allocation10], 4
      %s32 = int_to_ptr.vmem [resolvable:$true] %s31
      %37 = dma.hbm_to_vmem [thread:$0]  %s30, 256, %s32, [#allocation11], 128, 128, 8
    $region9: #{tpu_custom_call.1} parent=1 // pred_fallthru
      _
    // Predicated region
    $region10: #{tpu_custom_call.1} parent=1 // pred_check
      _
    $region11: #{tpu_custom_call.1} parent=1 // pred_check_branch
      %39 = sbr.rel (0) target = $region13
    $region12: #{tpu_custom_call.1} parent=1 // pred_region
      %41 = dma.done [#allocation8], 256
    $region13: #{tpu_custom_call.1} parent=1 // pred_fallthru
      _
    // Predicated region
    $region14: #{tpu_custom_call.1} parent=1 // pred_check
      _
    $region15: #{tpu_custom_call.1} parent=1 // pred_check_branch
      %43 = sbr.rel (0) target = $region17
    $region16: #{tpu_custom_call.1} parent=1 // pred_region
      %45 = dma.done [#allocation11], 256
    $region17: #{tpu_custom_call.1} parent=1 // pred_fallthru
      _
    %p46 = scmp.eq.s32.totalorder 0, 0
    // Predicated region
    $region18: #{tpu_custom_call.1} parent=1 // pred_check
      %p47 = pneg %p46
    $region19: #{tpu_custom_call.1} parent=1 // pred_check_branch
      %49 = sbr.rel (%p47) target = $region21
    $region20: #{tpu_custom_call.1} parent=1 // pred_region
      %50 = vst [vmem:[#allocation2] sm:$0xff] 0.0
      %51 = vst [vmem:[#allocation2 + $0x8] sm:$0xff] 0.0
      %52 = vst [vmem:[#allocation3] sm:$0xff] 0.0
      %53 = vst [vmem:[#allocation3 + $0x8] sm:$0xff] 0.0
      %54 = vst [vmem:[#allocation4] sm:$0xff] 0.0
      %55 = vst [vmem:[#allocation4 + $0x8] sm:$0xff] 0.0
    $region21: #{tpu_custom_call.1} parent=1 // pred_fallthru
      _
    %s56 = sld [smem:[#allocation6]]
    %s57 = smul.u32 0, 16
    %v58 = vlaneseq
    %v59 = vshrl.u32 %v58, 7
    %v60 = vadd.s32 %v59, 8
    %v61 = vlaneseq
    %v62 = vand.u32 %v61, 127
    %v63 = vstv %s57
    %v64 = vadd.s32 %v63, %v59
    %v65 = vadd.s32 %v63, %v60
    %v66 = vmul.u32 %v64, 128
    %v67 = vmul.u32 %v65, 128
    %v68 = vadd.s32 %v66, %v62
    %v69 = vadd.s32 %v67, %v62
    %v70 = vstv %s56
    %vm71 = vcmp.lt.s32.totalorder %v68, %v70
    %vm72 = vcmp.lt.s32.totalorder %v69, %v70
    %v73 = vld [vmem:[#allocation7] sm:$0xff]
    %v74 = vld [vmem:[#allocation7 + $0x8] sm:$0xff]
    %v75 = vld [vmem:[#allocation10] sm:$0xff]
    %v76 = vld [vmem:[#allocation10 + $0x8] sm:$0xff]
    %v77 = vxor.u32 %v73, 2147483648
    %v78 = vxor.u32 %v74, 2147483648
    %v79 = vmul.f32 %v77, 1.442695
    %v80 = vpow.pop %v79
    %v81 = vmul.f32 %v78, 1.442695
    %v82 = vpow.pop %v81
    %v83 = vadd.f32 %v80, 1.0
    %v84 = vadd.f32 %v82, 1.0
    %v85 = vrcp.pop %v83
    %v86 = vmul.f32 %v83, %v85
    %v87 = vsub.f32 1.0, %v86
    %v88 = vmul.f32 %v85, %v87
    %v89 = vadd.f32 %v85, %v88
    %vm90 = vweird.f32 %v83
    %vm91 = vweird.f32 %v85
    %vm92 = vmor %vm90, %vm91
    %v93 = vsel %vm92, %v85, %v89
    %v94 = vand.u32 2147483647, %v83
    %vm95 = vcmp.eq.f32.partialorder %v94, 8.507059e+37
    %v96 = vand.u32 %v83, 2147483648
    %v97 = vor.u32 1.1754944e-38, %v96
    %v98 = vsel %vm95, %v97, %v93
    %v99 = vmul.f32 1.0, %v98
    %v100 = vrcp.pop %v84
    %v101 = vmul.f32 %v84, %v100
    %v102 = vsub.f32 1.0, %v101
    %v103 = vmul.f32 %v100, %v102
    %v104 = vadd.f32 %v100, %v103
    %vm105 = vweird.f32 %v84
    %vm106 = vweird.f32 %v100
    %vm107 = vmor %vm105, %vm106
    %v108 = vsel %vm107, %v100, %v104
    %v109 = vand.u32 2147483647, %v84
    %vm110 = vcmp.eq.f32.partialorder %v109, 8.507059e+37
    %v111 = vand.u32 %v84, 2147483648
    %v112 = vor.u32 1.1754944e-38, %v111
    %v113 = vsel %vm110, %v112, %v108
    %v114 = vmul.f32 1.0, %v113
    %v115 = vsel %vm71, %v99, 0.0
    %v116 = vsel %vm72, %v114, 0.0
    %v117 = vsel %vm71, %v75, 0.0
    %v118 = vsel %vm72, %v76, 0.0
    %v119 = vld [vmem:[#allocation2] sm:$0xff]
    %v120 = vld [vmem:[#allocation2 + $0x8] sm:$0xff]
    %v121 = vmul.f32 %v115, %v117
    %v122 = vmul.f32 %v116, %v118
    %v123 = vadd.f32 %v119, %v121
    %v124 = vadd.f32 %v120, %v122
    %125 = vst [vmem:[#allocation2] sm:$0xff] %v123
    %126 = vst [vmem:[#allocation2 + $0x8] sm:$0xff] %v124
    %v127 = vld [vmem:[#allocation3] sm:$0xff]
    %v128 = vld [vmem:[#allocation3 + $0x8] sm:$0xff]
    %v129 = vadd.f32 %v127, %v115
    %v130 = vadd.f32 %v128, %v116
    %131 = vst [vmem:[#allocation3] sm:$0xff] %v129
    %132 = vst [vmem:[#allocation3 + $0x8] sm:$0xff] %v130
    %v133 = vld [vmem:[#allocation4] sm:$0xff]
    %v134 = vld [vmem:[#allocation4 + $0x8] sm:$0xff]
    %v135 = vadd.f32 %v133, %v117
    %v136 = vadd.f32 %v134, %v118
    %137 = vst [vmem:[#allocation4] sm:$0xff] %v135
    %138 = vst [vmem:[#allocation4 + $0x8] sm:$0xff] %v136
    // Predicated region
    $region22: #{tpu_custom_call.1} parent=1 // pred_check
      %p139 = pneg %p46
    $region23: #{tpu_custom_call.1} parent=1 // pred_check_branch
      %141 = sbr.rel (%p139) target = $region25
    $region24: #{tpu_custom_call.1} parent=1 // pred_region
      %v142 = vld [vmem:[#allocation2] sm:$0xff]
      %v143 = vld [vmem:[#allocation2 + $0x8] sm:$0xff]
      %v144 = vadd.f32 %v142, %v143
      %145 = vadd.xlane.f32.xlu0 %v144
      %v146 = vpop.xlane.xlu0 %145
      %v147 = vrot.slane %v146, 4
      %v148 = vadd.f32 %v146, %v147
      %v149 = vrot.slane %v148, 2
      %v150 = vadd.f32 %v148, %v149
      %v151 = vrot.slane %v150, 1
      %v152 = vadd.f32 %v150, %v151
      %s153 = vtos %v152
      %v154 = vld [vmem:[#allocation3] sm:$0xff]
      %v155 = vld [vmem:[#allocation3 + $0x8] sm:$0xff]
      %v156 = vadd.f32 %v154, %v155
      %157 = vadd.xlane.f32.xlu0 %v156
      %v158 = vpop.xlane.xlu0 %157
      %v159 = vrot.slane %v158, 4
      %v160 = vadd.f32 %v158, %v159
      %v161 = vrot.slane %v160, 2
      %v162 = vadd.f32 %v160, %v161
      %v163 = vrot.slane %v162, 1
      %v164 = vadd.f32 %v162, %v163
      %s165 = vtos %v164
      %v166 = vld [vmem:[#allocation4] sm:$0xff]
      %v167 = vld [vmem:[#allocation4 + $0x8] sm:$0xff]
      %v168 = vadd.f32 %v166, %v167
      %169 = vadd.xlane.f32.xlu0 %v168
      %v170 = vpop.xlane.xlu0 %169
      %v171 = vrot.slane %v170, 4
      %v172 = vadd.f32 %v170, %v171
      %v173 = vrot.slane %v172, 2
      %v174 = vadd.f32 %v172, %v173
      %v175 = vrot.slane %v174, 1
      %v176 = vadd.f32 %v174, %v175
      %s177 = vtos %v176
      %s178 = smul.f32 %s153, 2.0
      %s179 = sadd.f32 %s178, 1.0
      %s180 = sadd.f32 %s165, %s177
      %s181 = sadd.f32 %s180, 1.0
      %v182 = vstv %s181
      %v183 = vrcp.pop %v182
      %v184 = vmul.f32 %v182, %v183
      %v185 = vsub.f32 1.0, %v184
      %v186 = vmul.f32 %v183, %v185
      %v187 = vadd.f32 %v183, %v186
      %vm188 = vweird.f32 %v182
      %vm189 = vweird.f32 %v183
      %vm190 = vmor %vm188, %vm189
      %v191 = vsel %vm190, %v183, %v187
      %v192 = vand.u32 2147483647, %v182
      %vm193 = vcmp.eq.f32.partialorder %v192, 8.507059e+37
      %v194 = vand.u32 %v182, 2147483648
      %v195 = vor.u32 1.1754944e-38, %v194
      %v196 = vsel %vm193, %v195, %v191
      %s197 = vtos %v196
      %s198 = smul.f32 %s179, %s197
      %s199 = ssub.f32 1.0, %s198
      %v200 = vstv %s199
      %vm201 = vcmask 0
      %202 = vst.msk [vmem:[#allocation12] sm:$0x1] %vm201, %v200
    $region25: #{tpu_custom_call.1} parent=1 // pred_fallthru
      _
    // Predicated region
    $region26: #{tpu_custom_call.1} parent=1 // pred_check
      _
    $region27: #{tpu_custom_call.1} parent=1 // pred_check_branch
      %204 = sbr.rel (0) target = $region29
    $region28: #{tpu_custom_call.1} parent=1 // pred_region
      %206 = vsyncadd [#allocation9], 0
      %s208 = sshll.u32 [#allocation12], 4
      %s209 = int_to_ptr.vmem [resolvable:$true] %s208
      %s210 = sshll.u32 %s3, 4
      %s211 = int_to_ptr.hbm [resolvable:$true] %s210
      %213 = dma.vmem_to_hbm [thread:$0]  %s209, 16, %s211, [#allocation9]
    $region29: #{tpu_custom_call.1} parent=1 // pred_fallthru
      _
    // Predicated region
    $region30: #{tpu_custom_call.1} parent=1 // pred_check
      _
    $region31: #{tpu_custom_call.1} parent=1 // pred_check_branch
      %215 = sbr.rel (0) target = $region33
    $region32: #{tpu_custom_call.1} parent=1 // pred_region
      %217 = dma.done [#allocation9], 16
    $region33: #{tpu_custom_call.1} parent=1 // pred_fallthru
      _
    %218 = vsyncpa [#allocation8], 1
    %219 = vsyncpa [#allocation11], 1
    %220 = vsyncpa [#allocation9], 1

</llo_original>
